<compile_context>
chip_gen: v6e
topology: v6e:2x2x1
jax: 0.10.0
libtpu: 0.0.40
codegen_flags: <defaults>
</compile_context>

<pallas_src>
import jax
import jax.numpy as jnp
from jax.experimental import pallas as pl
from jax.experimental.pallas import tpu as pltpu


def _round_up(x, m):
    return ((x + m - 1) // m) * m


def mlp_kernel(x_ref, w1_ref, b1_ref, w2_ref, b2_ref, o_ref):
    # fc1: (TB, D) @ (D, Hp) on the MXU, bf16 operands, f32 accumulation.
    h = jnp.dot(x_ref[...], w1_ref[...], preferred_element_type=jnp.float32)
    h = h + b1_ref[...]                      # broadcast (1, Hp) bias, f32
    # sigmoid in f32: exp -> EUP, approx reciprocal -> EUP (vrcp).
    h = pl.reciprocal(1.0 + jnp.exp(-h), approx=True)
    # fc2: cast activation to bf16 for the MXU, accumulate in f32.
    out = jnp.dot(h.astype(w2_ref.dtype), w2_ref[...],
                  preferred_element_type=jnp.float32)
    o_ref[...] = (out + b2_ref[...]).astype(o_ref.dtype)


def net_forward(x, w1, b1, w2, b2, *, tb_max=512):
    """Forward pass of Net.

    x : (B, D) float32
    w1: (H, D), b1: (H,)   -- fc1 in torch.nn.Linear layout
    w2: (O, H), b2: (O,)   -- fc2 in torch.nn.Linear layout
    returns (B, O) float32
    """
    B, D = x.shape
    H = w1.shape[0]
    O = w2.shape[0]

    # Lane-dense padding of hidden / output dims.
    H_pad = _round_up(max(H, 128), 128)
    O_pad = _round_up(max(O, 128), 128)

    # Batch tiling: TB in [8, tb_max], batch padded to a multiple of TB.
    TB = min(tb_max, _round_up(B, 8))
    B_pad = _round_up(B, TB)

    # Pre-transpose + zero-pad parameters; biases as (1, pad) rows.
    w1_t = jnp.zeros((D, H_pad), jnp.float32).at[:, :H].set(w1.T)
    b1_p = jnp.zeros((1, H_pad), jnp.float32).at[:, :H].set(b1)
    w2_t = jnp.zeros((H_pad, O_pad), jnp.float32).at[:H, :O].set(w2.T)
    b2_p = jnp.zeros((1, O_pad), jnp.float32).at[:, :O].set(b2)

    x_p = jnp.zeros((B_pad, D), jnp.float32).at[:B].set(x)

    # bf16 MXU operands (f32 accumulation inside the kernel).
    x_p = x_p.astype(jnp.bfloat16)
    w1_t = w1_t.astype(jnp.bfloat16)
    w2_t = w2_t.astype(jnp.bfloat16)

    grid = (B_pad // TB,)
    out = pl.pallas_call(
        mlp_kernel,
        out_shape=jax.ShapeDtypeStruct((B_pad, O_pad), jnp.float32),
        grid=grid,
        in_specs=[
            pl.BlockSpec((TB, D), lambda i: (i, 0)),        # x: batch-tiled
            pl.BlockSpec((D, H_pad), lambda i: (0, 0)),     # weights/biases
            pl.BlockSpec((1, H_pad), lambda i: (0, 0)),     #   pinned -> stay
            pl.BlockSpec((H_pad, O_pad), lambda i: (0, 0)), #   resident in
            pl.BlockSpec((1, O_pad), lambda i: (0, 0)),     #   VMEM
        ],
        out_specs=pl.BlockSpec((TB, O_pad), lambda i: (i, 0)),
        compiler_params=pltpu.CompilerParams(
            dimension_semantics=("parallel",)),
    )(x_p, w1_t, b1_p, w2_t, b2_p)

    return out[:B, :O]


if __name__ == "__main__":
    # The original script reads 2-D points from '3class.txt' with 3 classes:
    #   input_size=2, hidden_size=32, output_size=3, batch=8.
    B, D, H, O = 8, 2, 32, 3

    key = jax.random.PRNGKey(0)
    kx, kw1, kb1, kw2, kb2 = jax.random.split(key, 5)

    x = jax.random.normal(kx, (B, D), dtype=jnp.float32)

    # Deterministic synthetic parameters (torch.nn.Linear-like uniform init).
    bound1 = 1.0 / jnp.sqrt(D)
    w1 = jax.random.uniform(kw1, (H, D), jnp.float32, -bound1, bound1)
    b1 = jax.random.uniform(kb1, (H,), jnp.float32, -bound1, bound1)
    bound2 = 1.0 / jnp.sqrt(H)
    w2 = jax.random.uniform(kw2, (O, H), jnp.float32, -bound2, bound2)
    b2 = jax.random.uniform(kb2, (O,), jnp.float32, -bound2, bound2)

    out = net_forward(x, w1, b1, w2, b2)
    out = jax.block_until_ready(out)

    # Reference in plain f32 JAX (same math as the PyTorch forward).
    ref = jax.nn.sigmoid(x @ w1.T + b1) @ w2.T + b2
    assert out.shape == (B, O)
    # bf16 MXU operands + approx reciprocal -> compare with relaxed tolerance.
    assert jnp.allclose(out, ref, atol=2e-2, rtol=2e-2), (
        f"max abs err = {jnp.max(jnp.abs(out - ref))}")

    print("KERNEL_OK")
</pallas_src>

<mosaic_0001>
module attributes {stable_mosaic.version = 11 : i64} {
  func.func @mlp_kernel(%arg0: i32, %arg1: memref<8x2xbf16, #tpu.memory_space<vmem>>, %arg2: memref<2x128xbf16, #tpu.memory_space<vmem>>, %arg3: memref<1x128xf32, #tpu.memory_space<vmem>>, %arg4: memref<128x128xbf16, #tpu.memory_space<vmem>>, %arg5: memref<1x128xf32, #tpu.memory_space<vmem>>, %arg6: memref<8x128xf32, #tpu.memory_space<vmem>>) attributes {dimension_semantics = [#tpu.dimension_semantics<parallel>], iteration_bounds = array<i64: 1>, scalar_prefetch = 0 : i64, scratch_operands = 0 : i64, tpu.core_type = #tpu.core_type<tc>, window_params = [{transform_indices = @transform_0, window_bounds = array<i64: 8, 2>}, {pipeline_mode = #tpu.pipeline_mode<synchronous>, transform_indices = @transform_1, window_bounds = array<i64: 2, 128>}, {pipeline_mode = #tpu.pipeline_mode<synchronous>, transform_indices = @transform_2, window_bounds = array<i64: 1, 128>}, {pipeline_mode = #tpu.pipeline_mode<synchronous>, transform_indices = @transform_3, window_bounds = array<i64: 128, 128>}, {pipeline_mode = #tpu.pipeline_mode<synchronous>, transform_indices = @transform_4, window_bounds = array<i64: 1, 128>}, {transform_indices = @transform_5, window_bounds = array<i64: 8, 128>}]} {
    %c0 = arith.constant 0 : index
    %c0_0 = arith.constant 0 : index
    %0 = vector.load %arg1[%c0, %c0_0] : memref<8x2xbf16, #tpu.memory_space<vmem>>, vector<8x2xbf16>
    %c0_1 = arith.constant 0 : index
    %c0_2 = arith.constant 0 : index
    %1 = vector.load %arg2[%c0_1, %c0_2] : memref<2x128xbf16, #tpu.memory_space<vmem>>, vector<2x128xbf16>
    %cst = arith.constant dense<0.000000e+00> : vector<8x128xf32>
    %2 = tpu.matmul %0, %1, %cst {dimension_numbers = #tpu.dot_dimension_numbers<[1], [0], [0], [1], [0, 0, 1, 1], [], []>} : vector<8x2xbf16>, vector<2x128xbf16>, vector<8x128xf32> -> vector<8x128xf32>
    %c0_3 = arith.constant 0 : index
    %c0_4 = arith.constant 0 : index
    %3 = vector.load %arg3[%c0_3, %c0_4] : memref<1x128xf32, #tpu.memory_space<vmem>>, vector<1x128xf32>
    %4 = vector.broadcast %3 : vector<1x128xf32> to vector<8x128xf32>
    %5 = arith.addf %2, %4 : vector<8x128xf32>
    %cst_5 = arith.constant 0.000000e+00 : f32
    %6 = vector.broadcast %cst_5 : f32 to vector<8x128xf32>
    %7 = arith.subf %6, %5 : vector<8x128xf32>
    %8 = math.exp %7 : vector<8x128xf32>
    %cst_6 = arith.constant 1.000000e+00 : f32
    %9 = vector.broadcast %cst_6 : f32 to vector<8x128xf32>
    %10 = arith.addf %9, %8 : vector<8x128xf32>
    %11 = tpu.reciprocal %10 {approx = true} : vector<8x128xf32> -> vector<8x128xf32>
    %12 = arith.truncf %11 : vector<8x128xf32> to vector<8x128xbf16>
    %c0_7 = arith.constant 0 : index
    %c0_8 = arith.constant 0 : index
    %13 = vector.load %arg4[%c0_7, %c0_8] : memref<128x128xbf16, #tpu.memory_space<vmem>>, vector<128x128xbf16>
    %cst_9 = arith.constant dense<0.000000e+00> : vector<8x128xf32>
    %14 = tpu.matmul %12, %13, %cst_9 {dimension_numbers = #tpu.dot_dimension_numbers<[1], [0], [0], [1], [0, 0, 1, 1], [], []>} : vector<8x128xbf16>, vector<128x128xbf16>, vector<8x128xf32> -> vector<8x128xf32>
    %c0_10 = arith.constant 0 : index
    %c0_11 = arith.constant 0 : index
    %15 = vector.load %arg5[%c0_10, %c0_11] : memref<1x128xf32, #tpu.memory_space<vmem>>, vector<1x128xf32>
    %16 = vector.broadcast %15 : vector<1x128xf32> to vector<8x128xf32>
    %17 = arith.addf %14, %16 : vector<8x128xf32>
    %c0_12 = arith.constant 0 : index
    %c0_13 = arith.constant 0 : index
    %18 = vector.load %arg6[%c0_12, %c0_13] : memref<8x128xf32, #tpu.memory_space<vmem>>, vector<8x128xf32>
    tpu.vector_store %arg6[%c0_12, %c0_13], %17 {strides = array<i32>} : memref<8x128xf32, #tpu.memory_space<vmem>>, vector<8x128xf32>,
    return
  }
  func.func @transform_0(%arg0: i32) -> (i32, i32) {
    %c0_i32 = arith.constant 0 : i32
    %c0_i32_0 = arith.constant 0 : i32
    return %arg0, %c0_i32 : i32, i32
  }
  func.func @transform_1(%arg0: i32) -> (i32, i32) {
    %c0_i32 = arith.constant 0 : i32
    %c0_i32_0 = arith.constant 0 : i32
    %c0_i32_1 = arith.constant 0 : i32
    return %c0_i32, %c0_i32_0 : i32, i32
  }
  func.func @transform_2(%arg0: i32) -> (i32, i32) {
    %c0_i32 = arith.constant 0 : i32
    %c0_i32_0 = arith.constant 0 : i32
    %c0_i32_1 = arith.constant 0 : i32
    return %c0_i32, %c0_i32_0 : i32, i32
  }
  func.func @transform_3(%arg0: i32) -> (i32, i32) {
    %c0_i32 = arith.constant 0 : i32
    %c0_i32_0 = arith.constant 0 : i32
    %c0_i32_1 = arith.constant 0 : i32
    return %c0_i32, %c0_i32_0 : i32, i32
  }
  func.func @transform_4(%arg0: i32) -> (i32, i32) {
    %c0_i32 = arith.constant 0 : i32
    %c0_i32_0 = arith.constant 0 : i32
    %c0_i32_1 = arith.constant 0 : i32
    return %c0_i32, %c0_i32_0 : i32, i32
  }
  func.func @transform_5(%arg0: i32) -> (i32, i32) {
    %c0_i32 = arith.constant 0 : i32
    %c0_i32_0 = arith.constant 0 : i32
    return %arg0, %c0_i32 : i32, i32
  }
}

</mosaic_0001>

<llo_original>
// kernel: tpu_custom_call.1
$region0: #{tpu_custom_call.1}
  #allocation0 [shape = 'u32[]', space=smem, size = 0x4, offset = 0x4, fixed_abs, tag = 'smem constant byte address 0x4 - core index']
  #allocation1 [shape = 'u32[144,128]{1,0:T(1,128)}', space=vmem, size = 0x12000, scoped, tag = 'internal scratch']
  %s0 = inlined_call_operand.vmem [shape: bf16[8,2], index: 0, kind: input, shape index: {}]
  %s1 = inlined_call_operand.vmem [shape: bf16[2,128], index: 1, kind: input, shape index: {}]
  %s2 = inlined_call_operand.vmem [shape: f32[1,128], index: 2, kind: input, shape index: {}]
  %s3 = inlined_call_operand.hbm [shape: bf16[128,128], index: 3, kind: input, shape index: {}]
  %s4 = inlined_call_operand.vmem [shape: f32[1,128], index: 4, kind: input, shape index: {}]
  %s5 = inlined_call_operand.hbm [shape: f32[8,128], index: 5, kind: output, shape index: {}]
  %s6 = sld [smem:[#allocation0]]
  $region34: #{tpu_custom_call.1} parent=0
    _
  %s8 = ssub.s32 1, %s6
  %s9 = scalar_select 0, %s8, %s6
  $region1: #{tpu_custom_call.1} parent=0
    #allocation2 [shape = 'u8[32768]{0}', space=vmem, size = 0x8000, scoped, tag = 'input window, operand 3, single buffered']
    #allocation3 [shape = 's32[1]{0}', space=sflag, size = 0x4, scoped, tag = 'scoped memory for tpu_custom_call.1']
    #allocation4 [shape = 's32[1]{0}', space=sflag, size = 0x4, scoped, tag = 'scoped memory for tpu_custom_call.1']
    #allocation5 [shape = 'u8[4096]{0}', space=vmem, size = 0x1000, scoped, tag = 'output window, operand 0, single buffered']
    %10 = vsyncpa [#allocation3], 0
    %11 = vsyncpa [#allocation4], 0
    // Predicated region
    $region2: #{tpu_custom_call.1} parent=1 // pred_check
      _
    $region3: #{tpu_custom_call.1} parent=1 // pred_check_branch
      %13 = sbr.rel (0) target = $region5
    $region4: #{tpu_custom_call.1} parent=1 // pred_region
      _
    $region5: #{tpu_custom_call.1} parent=1 // pred_fallthru
      _
    // Predicated region
    $region6: #{tpu_custom_call.1} parent=1 // pred_check
      _
    $region7: #{tpu_custom_call.1} parent=1 // pred_check_branch
      %15 = sbr.rel (0) target = $region9
    $region8: #{tpu_custom_call.1} parent=1 // pred_region
      _
    $region9: #{tpu_custom_call.1} parent=1 // pred_fallthru
      _
    // Predicated region
    $region10: #{tpu_custom_call.1} parent=1 // pred_check
      _
    $region11: #{tpu_custom_call.1} parent=1 // pred_check_branch
      %17 = sbr.rel (0) target = $region13
    $region12: #{tpu_custom_call.1} parent=1 // pred_region
      _
    $region13: #{tpu_custom_call.1} parent=1 // pred_fallthru
      _
    // Predicated region
    $region14: #{tpu_custom_call.1} parent=1 // pred_check
      _
    $region15: #{tpu_custom_call.1} parent=1 // pred_check_branch
      %19 = sbr.rel (0) target = $region17
    $region16: #{tpu_custom_call.1} parent=1 // pred_region
      %s21 = ssub.s32 1024, 1024
      %22 = vsyncadd [#allocation3], %s21
      %s23 = sshll.u32 [#allocation2], 4
      %s24 = int_to_ptr.vmem [resolvable:$true] %s23
      %29 = dma.hbm_to_vmem [thread:$0]  %s3, 1024, %s24, [#allocation3], 64, 64, 4
    $region17: #{tpu_custom_call.1} parent=1 // pred_fallthru
      _
    // Predicated region
    $region18: #{tpu_custom_call.1} parent=1 // pred_check
      _
    $region19: #{tpu_custom_call.1} parent=1 // pred_check_branch
      %31 = sbr.rel (0) target = $region21
    $region20: #{tpu_custom_call.1} parent=1 // pred_region
      _
    $region21: #{tpu_custom_call.1} parent=1 // pred_fallthru
      _
    // Predicated region
    $region22: #{tpu_custom_call.1} parent=1 // pred_check
      _
    $region23: #{tpu_custom_call.1} parent=1 // pred_check_branch
      %33 = sbr.rel (0) target = $region25
    $region24: #{tpu_custom_call.1} parent=1 // pred_region
      %34 = dma.done [#allocation3], 1024
    $region25: #{tpu_custom_call.1} parent=1 // pred_fallthru
      _
    %v36 = vld [vmem:[%s0] sm:$0xf]
    %v37 = vld [vmem:[%s1] sm:$0x1]
    %v38 = vld [vmem:[%s2] sm:$0x1]
    %v40 = vlaneseq
    %v41 = vshrl.u32 %v40, 7
    %v42 = vsub.s32 0, %v41
    %v43 = vrot.slane %v38, %v42
    %vm45 = vcmask 15360
    %v47 = vsel %vm45, %v36, 0
    %vm49 = vcmask 1040384
    %v51 = vsel %vm49, %v37, 0
    %53 = vmatprep.subr.bf16.mxu0 0
    %54 = vmatpush1.bf16.msra.mxu0 0
    %55 = vmatprep.subr.bf16.mxu0 0
    %56 = vmatpush1.bf16.msra.mxu0 0
    %57 = vmatprep.subr.bf16.mxu0 0
    %58 = vmatpush1.bf16.msra.mxu0 0
    %59 = vmatprep.subr.bf16.mxu0 0
    %60 = vmatpush1.bf16.msra.mxu0 0
    %61 = vmatprep.subr.bf16.mxu0 0
    %62 = vmatpush1.bf16.msra.mxu0 0
    %63 = vmatprep.subr.bf16.mxu0 0
    %64 = vmatpush1.bf16.msra.mxu0 0
    %65 = vmatprep.subr.bf16.mxu0 0
    %66 = vmatpush1.bf16.msra.mxu0 0
    %67 = vmatprep.subr.bf16.mxu0 0
    %68 = vmatpush1.bf16.msra.mxu0 %v51
    %69 = vmatprep.subr.bf16.mxu0 0
    %70 = vmatpush2.bf16.msra.mxu0 0
    %71 = vmatprep.subr.bf16.mxu0 0
    %72 = vmatpush2.bf16.msra.mxu0 0
    %73 = vmatprep.subr.bf16.mxu0 0
    %74 = vmatpush2.bf16.msra.mxu0 0
    %75 = vmatprep.subr.bf16.mxu0 0
    %76 = vmatpush2.bf16.msra.mxu0 0
    %77 = vmatprep.subr.bf16.mxu0 0
    %78 = vmatpush2.bf16.msra.mxu0 0
    %79 = vmatprep.subr.bf16.mxu0 0
    %80 = vmatpush2.bf16.msra.mxu0 0
    %81 = vmatprep.subr.bf16.mxu0 0
    %82 = vmatpush2.bf16.msra.mxu0 0
    %83 = vmatprep.subr.bf16.mxu0 0
    %84 = vmatpush2.bf16.msra.mxu0 0
    %85 = vmatprep.mubr.bf16.mxu0 0
    %86 = vmatmul.mubr.bf16.gmra.mxu0 %v47
    %v87 = vpop.f32.mrf.mxu0
    %v88 = vadd.f32 %v43, %v87
    %v89 = vpop.f32.mrf.mxu0
    %v90 = vpop.f32.mrf.mxu0
    %v91 = vpop.f32.mrf.mxu0
    %92 = vdwg.mxu0
    %v93 = vsub.f32 0.0, %v88
    %v94 = vmul.f32 %v93, 1.442695
    %v95 = vpow.pop %v94
    %v96 = vadd.f32 %v95, 1.0
    %v97 = vrcp.pop %v96
    %v98 = vpack.c.bf16 %v97, %v97
    %v99 = vld [vmem:[#allocation2] sm:$0xf]
    %v100 = vld [vmem:[#allocation2 + $0x4] sm:$0xf]
    %v101 = vld [vmem:[#allocation2 + $0x8] sm:$0xf]
    %v102 = vld [vmem:[#allocation2 + $0xc] sm:$0xf]
    %v103 = vld [vmem:[#allocation2 + $0x10] sm:$0xf]
    %v104 = vld [vmem:[#allocation2 + $0x14] sm:$0xf]
    %v105 = vld [vmem:[#allocation2 + $0x18] sm:$0xf]
    %v106 = vld [vmem:[#allocation2 + $0x1c] sm:$0xf]
    %v107 = vld [vmem:[#allocation2 + $0x20] sm:$0xf]
    %v108 = vld [vmem:[#allocation2 + $0x24] sm:$0xf]
    %v109 = vld [vmem:[#allocation2 + $0x28] sm:$0xf]
    %v110 = vld [vmem:[#allocation2 + $0x2c] sm:$0xf]
    %v111 = vld [vmem:[#allocation2 + $0x30] sm:$0xf]
    %v112 = vld [vmem:[#allocation2 + $0x34] sm:$0xf]
    %v113 = vld [vmem:[#allocation2 + $0x38] sm:$0xf]
    %v114 = vld [vmem:[#allocation2 + $0x3c] sm:$0xf]
    %v115 = vld [vmem:[%s4] sm:$0x1]
    %v117 = vlaneseq
    %v118 = vshrl.u32 %v117, 7
    %v119 = vsub.s32 0, %v118
    %v120 = vrot.slane %v115, %v119
    %v138 = vunpack.c.l.b16 %v99
    %v139 = vunpack.c.l.b16 %v100
    %v140 = vunpack.c.l.b16 %v101
    %v141 = vunpack.c.l.b16 %v102
    %v142 = vunpack.c.l.b16 %v103
    %v143 = vunpack.c.l.b16 %v104
    %v144 = vunpack.c.l.b16 %v105
    %v145 = vunpack.c.l.b16 %v106
    %v146 = vunpack.c.l.b16 %v107
    %v147 = vunpack.c.l.b16 %v108
    %v148 = vunpack.c.l.b16 %v109
    %v149 = vunpack.c.l.b16 %v110
    %v150 = vunpack.c.l.b16 %v111
    %v151 = vunpack.c.l.b16 %v112
    %v152 = vunpack.c.l.b16 %v113
    %v153 = vunpack.c.l.b16 %v114
    %v154 = vpack.c.b16 %v139, %v138
    %v155 = vpack.c.b16 %v141, %v140
    %v156 = vpack.c.b16 %v143, %v142
    %v157 = vpack.c.b16 %v145, %v144
    %v158 = vpack.c.b16 %v147, %v146
    %v159 = vpack.c.b16 %v149, %v148
    %v160 = vpack.c.b16 %v151, %v150
    %v161 = vpack.c.b16 %v153, %v152
    %170 = vmatprep.subr.bf16.mxu0 0
    %171 = vmatpush1.bf16.msra.mxu0 %v161
    %172 = vmatprep.subr.bf16.mxu0 0
    %173 = vmatpush1.bf16.msra.mxu0 %v160
    %174 = vmatprep.subr.bf16.mxu0 0
    %175 = vmatpush1.bf16.msra.mxu0 %v159
    %176 = vmatprep.subr.bf16.mxu0 0
    %177 = vmatpush1.bf16.msra.mxu0 %v158
    %178 = vmatprep.subr.bf16.mxu0 0
    %179 = vmatpush1.bf16.msra.mxu0 %v157
    %180 = vmatprep.subr.bf16.mxu0 0
    %181 = vmatpush1.bf16.msra.mxu0 %v156
    %182 = vmatprep.subr.bf16.mxu0 0
    %183 = vmatpush1.bf16.msra.mxu0 %v155
    %184 = vmatprep.subr.bf16.mxu0 0
    %185 = vmatpush1.bf16.msra.mxu0 %v154
    %186 = vmatprep.subr.bf16.mxu0 0
    %187 = vmatpush2.bf16.msra.mxu0 0
    %188 = vmatprep.subr.bf16.mxu0 0
    %189 = vmatpush2.bf16.msra.mxu0 0
    %190 = vmatprep.subr.bf16.mxu0 0
    %191 = vmatpush2.bf16.msra.mxu0 0
    %192 = vmatprep.subr.bf16.mxu0 0
    %193 = vmatpush2.bf16.msra.mxu0 0
    %194 = vmatprep.subr.bf16.mxu0 0
    %195 = vmatpush2.bf16.msra.mxu0 0
    %196 = vmatprep.subr.bf16.mxu0 0
    %197 = vmatpush2.bf16.msra.mxu0 0
    %198 = vmatprep.subr.bf16.mxu0 0
    %199 = vmatpush2.bf16.msra.mxu0 0
    %200 = vmatprep.subr.bf16.mxu0 0
    %201 = vmatpush2.bf16.msra.mxu0 0
    %202 = vmatprep.mubr.bf16.mxu0 0
    %203 = vmatmul.mubr.bf16.gmra.mxu0 %v98
    %v204 = vpop.f32.mrf.mxu0
    %v205 = vadd.f32 %v120, %v204
    %v206 = vpop.f32.mrf.mxu0
    %v207 = vpop.f32.mrf.mxu0
    %v208 = vpop.f32.mrf.mxu0
    %209 = vdwg.mxu0
    %210 = vst [vmem:[#allocation5] sm:$0xff] %v205
    // Predicated region
    $region26: #{tpu_custom_call.1} parent=1 // pred_check
      _
    $region27: #{tpu_custom_call.1} parent=1 // pred_check_branch
      %212 = sbr.rel (0) target = $region29
    $region28: #{tpu_custom_call.1} parent=1 // pred_region
      %s214 = ssub.s32 128, 128
      %215 = vsyncadd [#allocation4], %s214
      %s217 = sshll.u32 [#allocation5], 4
      %s218 = int_to_ptr.vmem [resolvable:$true] %s217
      %220 = dma.vmem_to_hbm [thread:$0]  %s218, 128, %s5, [#allocation4]
    $region29: #{tpu_custom_call.1} parent=1 // pred_fallthru
      _
    // Predicated region
    $region30: #{tpu_custom_call.1} parent=1 // pred_check
      _
    $region31: #{tpu_custom_call.1} parent=1 // pred_check_branch
      %222 = sbr.rel (0) target = $region33
    $region32: #{tpu_custom_call.1} parent=1 // pred_region
      %223 = dma.done [#allocation4], 128
    $region33: #{tpu_custom_call.1} parent=1 // pred_fallthru
      _
    %224 = vsyncpa [#allocation3], 1
    %225 = vsyncpa [#allocation4], 1

</llo_original>
